<compile_context>
chip_gen: v5e
topology: v5e:2x2
jax: 0.10.0
libtpu: 0.0.40
codegen_flags: <defaults>
</compile_context>

<pallas_src>
import functools

import jax
import jax.numpy as jnp
from jax.experimental import pallas as pl
from jax.experimental.pallas import tpu as pltpu

N_ACTIONS = 2
N_STATES = 20 * 2   # 40
HIDDEN = 10
_LANE = 128


def _mlp_kernel(xT_ref, w1_ref, b1_ref, w2_ref, b2_ref, oT_ref):
    # Feature-major: xT (40, TB), w1 (10, 40), b1 (10, 1), w2 (2, 10), b2 (2, 1)
    xT = xT_ref[...]
    h = jnp.dot(w1_ref[...], xT, preferred_element_type=jnp.float32) + b1_ref[...]
    h = jnp.maximum(h, 0.0)                                          # ReLU
    out = jnp.dot(w2_ref[...], h, preferred_element_type=jnp.float32) + b2_ref[...]
    oT_ref[...] = out.astype(oT_ref.dtype)                           # lane-dense store


def _round_up(n, m):
    return (n + m - 1) // m * m


@functools.partial(jax.jit, static_argnames=("tb", "small_batch_bypass"))
def net_forward(x, w1, b1, w2, b2, *, tb=8192, small_batch_bypass=0):
    """Forward pass of Net.

    x : (B, N_STATES) f32
    w1: (HIDDEN, N_STATES)   b1: (HIDDEN,)     -- PyTorch nn.Linear layout
    w2: (N_ACTIONS, HIDDEN)  b2: (N_ACTIONS,)
    returns (B, N_ACTIONS) f32
    """
    B = x.shape[0]

    # Tiny-batch bypass: for the canonical DQN batch the whole network is
    # sub-microsecond of VPU work; pallas_call launch/DMA overhead dominates.
    if B <= small_batch_bypass:
        h = jnp.maximum(x @ w1.T + b1, 0.0)
        return h @ w2.T + b2

    # Feature-major: batch goes on the 128-lane axis.
    xT = x.T                                                # (N_STATES, B)

    B128 = _round_up(max(B, 1), _LANE)
    TB = min(tb, B128)
    if B128 >= 2 * _LANE:
        # Ensure >= 2 grid steps so v7x's two TensorCores both run.
        TB = min(TB, _round_up(pl.cdiv(B128, 2), _LANE))
    B_pad = _round_up(B128, TB)
    if B_pad != B:
        xT = jnp.pad(xT, ((0, 0), (0, B_pad - B)))
    grid = (B_pad // TB,)

    b1c = b1.reshape(HIDDEN, 1).astype(jnp.float32)
    b2c = b2.reshape(N_ACTIONS, 1).astype(jnp.float32)

    def _full(shape):
        # Whole-array block, VMEM-resident across every grid step.
        return pl.BlockSpec(shape, lambda i: (0, 0))

    outT = pl.pallas_call(
        _mlp_kernel,
        out_shape=jax.ShapeDtypeStruct((N_ACTIONS, B_pad), jnp.float32),
        grid=grid,
        in_specs=[
            pl.BlockSpec((N_STATES, TB), lambda i: (0, i)),  # xT: tiled over batch (lanes)
            _full((HIDDEN, N_STATES)),                       # w1
            _full((HIDDEN, 1)),                              # b1
            _full((N_ACTIONS, HIDDEN)),                      # w2
            _full((N_ACTIONS, 1)),                           # b2
        ],
        out_specs=pl.BlockSpec((N_ACTIONS, TB), lambda i: (0, i)),
        compiler_params=pltpu.CompilerParams(
            dimension_semantics=("parallel",),               # dual-TC sharding on v7x
            vmem_limit_bytes=32 * 1024 * 1024,
        ),
    )(xT, w1, b1c, w2, b2c)
    return outT[:, :B].T


def init_params(key):
    """Deterministic init matching the PyTorch module's shapes/layout.
    Weights ~ Normal(0, 0.1) (as in __init__); biases use PyTorch's default
    Linear init: Uniform(-1/sqrt(fan_in), 1/sqrt(fan_in))."""
    k1, k2, k3, k4 = jax.random.split(key, 4)
    w1 = 0.1 * jax.random.normal(k1, (HIDDEN, N_STATES), dtype=jnp.float32)
    bound1 = 1.0 / jnp.sqrt(float(N_STATES))
    b1 = jax.random.uniform(k2, (HIDDEN,), minval=-bound1, maxval=bound1,
                            dtype=jnp.float32)
    w2 = 0.1 * jax.random.normal(k3, (N_ACTIONS, HIDDEN), dtype=jnp.float32)
    bound2 = 1.0 / jnp.sqrt(float(HIDDEN))
    b2 = jax.random.uniform(k4, (N_ACTIONS,), minval=-bound2, maxval=bound2,
                            dtype=jnp.float32)
    return w1, b1, w2, b2


if __name__ == "__main__":
    key = jax.random.PRNGKey(0)
    kx, kp = jax.random.split(key)
    w1, b1, w2, b2 = init_params(kp)

    def ref_fwd(x):
        return jnp.maximum(x @ w1.T + b1, 0.0) @ w2.T + b2

    # Small DQN-style batch, forced through the Pallas kernel (grid=(1,), TB=128).
    B = 8
    x = jax.random.normal(kx, (B, N_STATES), dtype=jnp.float32)
    out = net_forward(x, w1, b1, w2, b2)
    jax.block_until_ready(out)
    assert out.shape == (B, N_ACTIONS)
    assert jnp.allclose(out, ref_fwd(x), atol=1e-5, rtol=1e-5)

    # Tile-non-multiple batch: exercises padding + a 2-step grid (both TCs on v7x).
    B2 = 300
    x2 = jax.random.normal(kx, (B2, N_STATES), dtype=jnp.float32)
    out2 = net_forward(x2, w1, b1, w2, b2)
    jax.block_until_ready(out2)
    assert out2.shape == (B2, N_ACTIONS)
    assert jnp.allclose(out2, ref_fwd(x2), atol=1e-5, rtol=1e-5)

    # Small-batch bypass path (pure-XLA fallback for tiny DQN batches).
    out3 = net_forward(x, w1, b1, w2, b2, small_batch_bypass=512)
    jax.block_until_ready(out3)
    assert jnp.allclose(out3, ref_fwd(x), atol=1e-5, rtol=1e-5)

    print("KERNEL_OK")
</pallas_src>

<mosaic_0001>
module attributes {stable_mosaic.version = 11 : i64} {
  func.func @_mlp_kernel(%arg0: i32, %arg1: memref<40x128xf32, #tpu.memory_space<vmem>>, %arg2: memref<10x40xf32, #tpu.memory_space<vmem>>, %arg3: memref<10x1xf32, #tpu.memory_space<vmem>>, %arg4: memref<2x10xf32, #tpu.memory_space<vmem>>, %arg5: memref<2x1xf32, #tpu.memory_space<vmem>>, %arg6: memref<2x128xf32, #tpu.memory_space<vmem>>) attributes {dimension_semantics = [#tpu.dimension_semantics<parallel>], iteration_bounds = array<i64: 1>, scalar_prefetch = 0 : i64, scratch_operands = 0 : i64, tpu.core_type = #tpu.core_type<tc>, window_params = [{transform_indices = @transform_0, window_bounds = array<i64: 40, 128>}, {pipeline_mode = #tpu.pipeline_mode<synchronous>, transform_indices = @transform_1, window_bounds = array<i64: 10, 40>}, {pipeline_mode = #tpu.pipeline_mode<synchronous>, transform_indices = @transform_2, window_bounds = array<i64: 10, 1>}, {pipeline_mode = #tpu.pipeline_mode<synchronous>, transform_indices = @transform_3, window_bounds = array<i64: 2, 10>}, {pipeline_mode = #tpu.pipeline_mode<synchronous>, transform_indices = @transform_4, window_bounds = array<i64: 2, 1>}, {transform_indices = @transform_5, window_bounds = array<i64: 2, 128>}]} {
    %c0 = arith.constant 0 : index
    %c0_0 = arith.constant 0 : index
    %0 = vector.load %arg1[%c0, %c0_0] : memref<40x128xf32, #tpu.memory_space<vmem>>, vector<40x128xf32>
    %c0_1 = arith.constant 0 : index
    %c0_2 = arith.constant 0 : index
    %1 = vector.load %arg2[%c0_1, %c0_2] : memref<10x40xf32, #tpu.memory_space<vmem>>, vector<10x40xf32>
    %cst = arith.constant dense<0.000000e+00> : vector<10x128xf32>
    %2 = tpu.matmul %1, %0, %cst {dimension_numbers = #tpu.dot_dimension_numbers<[1], [0], [0], [1], [0, 0, 1, 1], [], []>} : vector<10x40xf32>, vector<40x128xf32>, vector<10x128xf32> -> vector<10x128xf32>
    %c0_3 = arith.constant 0 : index
    %c0_4 = arith.constant 0 : index
    %3 = vector.load %arg3[%c0_3, %c0_4] : memref<10x1xf32, #tpu.memory_space<vmem>>, vector<10x1xf32>
    %4 = vector.broadcast %3 : vector<10x1xf32> to vector<10x128xf32>
    %5 = arith.addf %2, %4 : vector<10x128xf32>
    %cst_5 = arith.constant 0.000000e+00 : f32
    %6 = vector.broadcast %cst_5 : f32 to vector<10x128xf32>
    %7 = arith.maximumf %5, %6 : vector<10x128xf32>
    %c0_6 = arith.constant 0 : index
    %c0_7 = arith.constant 0 : index
    %8 = vector.load %arg4[%c0_6, %c0_7] : memref<2x10xf32, #tpu.memory_space<vmem>>, vector<2x10xf32>
    %cst_8 = arith.constant dense<0.000000e+00> : vector<2x128xf32>
    %9 = tpu.matmul %8, %7, %cst_8 {dimension_numbers = #tpu.dot_dimension_numbers<[1], [0], [0], [1], [0, 0, 1, 1], [], []>} : vector<2x10xf32>, vector<10x128xf32>, vector<2x128xf32> -> vector<2x128xf32>
    %c0_9 = arith.constant 0 : index
    %c0_10 = arith.constant 0 : index
    %10 = vector.load %arg5[%c0_9, %c0_10] : memref<2x1xf32, #tpu.memory_space<vmem>>, vector<2x1xf32>
    %11 = vector.broadcast %10 : vector<2x1xf32> to vector<2x128xf32>
    %12 = arith.addf %9, %11 : vector<2x128xf32>
    %c0_11 = arith.constant 0 : index
    %c0_12 = arith.constant 0 : index
    %13 = vector.load %arg6[%c0_11, %c0_12] : memref<2x128xf32, #tpu.memory_space<vmem>>, vector<2x128xf32>
    tpu.vector_store %arg6[%c0_11, %c0_12], %12 {strides = array<i32>} : memref<2x128xf32, #tpu.memory_space<vmem>>, vector<2x128xf32>,
    return
  }
  func.func @transform_0(%arg0: i32) -> (i32, i32) {
    %c0_i32 = arith.constant 0 : i32
    %c0_i32_0 = arith.constant 0 : i32
    return %c0_i32, %arg0 : i32, i32
  }
  func.func @transform_1(%arg0: i32) -> (i32, i32) {
    %c0_i32 = arith.constant 0 : i32
    %c0_i32_0 = arith.constant 0 : i32
    %c0_i32_1 = arith.constant 0 : i32
    return %c0_i32, %c0_i32_0 : i32, i32
  }
  func.func @transform_2(%arg0: i32) -> (i32, i32) {
    %c0_i32 = arith.constant 0 : i32
    %c0_i32_0 = arith.constant 0 : i32
    %c0_i32_1 = arith.constant 0 : i32
    return %c0_i32, %c0_i32_0 : i32, i32
  }
  func.func @transform_3(%arg0: i32) -> (i32, i32) {
    %c0_i32 = arith.constant 0 : i32
    %c0_i32_0 = arith.constant 0 : i32
    %c0_i32_1 = arith.constant 0 : i32
    return %c0_i32, %c0_i32_0 : i32, i32
  }
  func.func @transform_4(%arg0: i32) -> (i32, i32) {
    %c0_i32 = arith.constant 0 : i32
    %c0_i32_0 = arith.constant 0 : i32
    %c0_i32_1 = arith.constant 0 : i32
    return %c0_i32, %c0_i32_0 : i32, i32
  }
  func.func @transform_5(%arg0: i32) -> (i32, i32) {
    %c0_i32 = arith.constant 0 : i32
    %c0_i32_0 = arith.constant 0 : i32
    return %c0_i32, %arg0 : i32, i32
  }
}

</mosaic_0001>

<llo_original>
// kernel: net_forward.1
$region0: #{net_forward.1}
  #allocation0 [shape = 'u32[]', space=smem, size = 0x4, offset = 0x4, fixed_abs, tag = 'smem constant byte address 0x4 - core index']
  #allocation1 [shape = 'u32[72,128]{1,0:T(1,128)}', space=vmem, size = 0x9000, scoped, tag = 'internal scratch']
  %s0 = inlined_call_operand.vmem [shape: f32[40,128], index: 0, kind: input, shape index: {}]
  %s1 = inlined_call_operand.vmem [shape: f32[10,40], index: 1, kind: input, shape index: {}]
  %s2 = inlined_call_operand.vmem [shape: f32[10,1], index: 2, kind: input, shape index: {}]
  %s3 = inlined_call_operand.vmem [shape: f32[2,10], index: 3, kind: input, shape index: {}]
  %s4 = inlined_call_operand.vmem [shape: f32[2,1], index: 4, kind: input, shape index: {}]
  %s5 = inlined_call_operand.vmem [shape: f32[2,128], index: 5, kind: output, shape index: {}]
  %s6 = sld [smem:[#allocation0]]
  $region30: #{net_forward.1} parent=0
    _
  %s8 = ssub.s32 1, %s6
  %s9 = scalar_select 0, %s8, %s6
  // Predicated region
  $region2: #{net_forward.1} parent=0 // pred_check
    _
  $region3: #{net_forward.1} parent=0 // pred_check_branch
    %11 = sbr.rel (0) target = $region5
  $region4: #{net_forward.1} parent=0 // pred_region
    _
  $region5: #{net_forward.1} parent=0 // pred_fallthru
    _
  // Predicated region
  $region6: #{net_forward.1} parent=0 // pred_check
    _
  $region7: #{net_forward.1} parent=0 // pred_check_branch
    %13 = sbr.rel (0) target = $region9
  $region8: #{net_forward.1} parent=0 // pred_region
    _
  $region9: #{net_forward.1} parent=0 // pred_fallthru
    _
  // Predicated region
  $region10: #{net_forward.1} parent=0 // pred_check
    _
  $region11: #{net_forward.1} parent=0 // pred_check_branch
    %15 = sbr.rel (0) target = $region13
  $region12: #{net_forward.1} parent=0 // pred_region
    _
  $region13: #{net_forward.1} parent=0 // pred_fallthru
    _
  // Predicated region
  $region14: #{net_forward.1} parent=0 // pred_check
    _
  $region15: #{net_forward.1} parent=0 // pred_check_branch
    %17 = sbr.rel (0) target = $region17
  $region16: #{net_forward.1} parent=0 // pred_region
    _
  $region17: #{net_forward.1} parent=0 // pred_fallthru
    _
  // Predicated region
  $region18: #{net_forward.1} parent=0 // pred_check
    _
  $region19: #{net_forward.1} parent=0 // pred_check_branch
    %19 = sbr.rel (0) target = $region21
  $region20: #{net_forward.1} parent=0 // pred_region
    _
  $region21: #{net_forward.1} parent=0 // pred_fallthru
    _
  %v20 = vld [vmem:[%s0] sm:$0xff]
  %v21 = vld [vmem:[%s0 + $0x8] sm:$0xff]
  %v22 = vld [vmem:[%s0 + $0x10] sm:$0xff]
  %v23 = vld [vmem:[%s0 + $0x18] sm:$0xff]
  %v24 = vld [vmem:[%s0 + $0x20] sm:$0xff]
  %v25 = vld [vmem:[%s1] sm:$0xff]
  %v26 = vld [vmem:[%s1 + $0x8] sm:$0x3]
  %v27 = vld [vmem:[%s2] sm:$0xff]
  %v28 = vld [vmem:[%s2 + $0x8] sm:$0x3]
  %30 = vset.pattern.permute.xlu0 0
  %31 = vperm.xlu0 %30, %v27
  %v32 = vpop.permute.xlu0 %31
  %35 = vset.pattern.permute.xlu0 0
  %36 = vperm.xlu0 %35, %v28
  %v37 = vpop.permute.xlu0 %36
  %vm39 = vcmask 326656
  %v41 = vsel %vm39, %v25, 0
  %v44 = vsel %vm39, %v26, 0
  %46 = vmatpush.msra.mxu0 0.0
  %47 = vmatpush.msra.mxu0 0.0
  %48 = vmatpush.msra.mxu0 0.0
  %49 = vmatpush.msra.mxu0 0.0
  %50 = vmatpush.msra.mxu0 0.0
  %51 = vmatpush.msra.mxu0 0.0
  %52 = vmatpush.msra.mxu0 0.0
  %53 = vmatpush.msra.mxu0 0.0
  %54 = vmatpush.msra.mxu0 0.0
  %55 = vmatpush.msra.mxu0 0.0
  %56 = vmatpush.msra.mxu0 0.0
  %57 = vmatpush.msra.mxu0 %v24
  %58 = vmatpush.msra.mxu0 %v23
  %59 = vmatpush.msra.mxu0 %v22
  %60 = vmatpush.msra.mxu0 %v21
  %61 = vmatpush.msra.mxu0 %v20
  %62 = vmatmul.f32.gmra.mxu0 %v41
  %v63 = vpop.f32.mrf.mxu0
  %v64 = vadd.f32 %v32, %v63
  %65 = vmatmul.f32.gmra.mxu0 %v44
  %v66 = vpop.f32.mrf.mxu0
  %v67 = vadd.f32 %v37, %v66
  %68 = vdwg.mxu0
  %v69 = vmax.f32 %v64, 0.0
  %v70 = vmax.f32 %v67, 0.0
  %v71 = vld [vmem:[%s3] sm:$0x3]
  %v72 = vld [vmem:[%s4] sm:$0x3]
  %74 = vset.pattern.permute.xlu0 0
  %75 = vperm.xlu0 %74, %v72
  %v76 = vpop.permute.xlu0 %75
  %vm78 = vcmask 80896
  %v80 = vsel %vm78, %v71, 0
  %vm82 = vcmask 1041408
  %v84 = vsel %vm82, %v70, 0
  %86 = vmatpush.msra.mxu0 0.0
  %87 = vmatpush.msra.mxu0 0.0
  %88 = vmatpush.msra.mxu0 0.0
  %89 = vmatpush.msra.mxu0 0.0
  %90 = vmatpush.msra.mxu0 0.0
  %91 = vmatpush.msra.mxu0 0.0
  %92 = vmatpush.msra.mxu0 0.0
  %93 = vmatpush.msra.mxu0 0.0
  %94 = vmatpush.msra.mxu0 0.0
  %95 = vmatpush.msra.mxu0 0.0
  %96 = vmatpush.msra.mxu0 0.0
  %97 = vmatpush.msra.mxu0 0.0
  %98 = vmatpush.msra.mxu0 0.0
  %99 = vmatpush.msra.mxu0 0.0
  %100 = vmatpush.msra.mxu0 %v84
  %101 = vmatpush.msra.mxu0 %v69
  %102 = vmatmul.f32.gmra.mxu0 %v80
  %v103 = vpop.f32.mrf.mxu0
  %v104 = vadd.f32 %v76, %v103
  %105 = vdwg.mxu0
  %106 = vst [vmem:[%s5] sm:$0x3] %v104
  // Predicated region
  $region22: #{net_forward.1} parent=0 // pred_check
    _
  $region23: #{net_forward.1} parent=0 // pred_check_branch
    %108 = sbr.rel (0) target = $region25
  $region24: #{net_forward.1} parent=0 // pred_region
    _
  $region25: #{net_forward.1} parent=0 // pred_fallthru
    _
  // Predicated region
  $region26: #{net_forward.1} parent=0 // pred_check
    _
  $region27: #{net_forward.1} parent=0 // pred_check_branch
    %110 = sbr.rel (0) target = $region29
  $region28: #{net_forward.1} parent=0 // pred_region
    _
  $region29: #{net_forward.1} parent=0 // pred_fallthru
    _

</llo_original>
